<compile_context>
chip_gen: v7x
topology: tpu7x:2x2x1
jax: 0.10.0
libtpu: 0.0.40
codegen_flags: <defaults>
</compile_context>

<pallas_src>
import functools

import jax
import jax.numpy as jnp
from jax import lax
from jax.experimental import pallas as pl
from jax.experimental.pallas import tpu as pltpu


# ---------------------------------------------------------------------------
# helpers
# ---------------------------------------------------------------------------

def _round_up(n, m):
    return ((n + m - 1) // m) * m


@functools.lru_cache(maxsize=None)
def _vmem_limit_bytes():
    """~75% of physical VMEM (96 MiB on v5e/v6e, 48 MiB on v7x), capped at 100 MiB."""
    cap = 64 * 1024 * 1024
    try:
        cap = int(pltpu.get_tpu_info().vmem_capacity_bytes)
    except Exception:
        pass
    return min((cap * 3) // 4, 100 * 1024 * 1024)


def _pick_row_tile(n, target):
    """Largest tile <= target dividing n that is a multiple of 8 (or == n)."""
    if n % target == 0:
        return target
    for t in range(min(target, n), 0, -1):
        if n % t == 0 and (t % 8 == 0 or t == n):
            return t
    return n


def _pick_col_tile(din, dout, itemsize, budget=8 * 1024 * 1024):
    """Weight column tile so one (din, tn) block (double-buffered) fits the budget."""
    if 2 * din * dout * itemsize <= budget:
        return dout
    for t in range(dout, 0, -128):
        if dout % t == 0 and 2 * din * t * itemsize <= budget:
            return t
    return dout


def _tile_and_pad(n, target):
    """(tile, padded_n): tile <= target (multiple of 8), padded_n multiple of tile."""
    if n >= target:
        return target, _round_up(n, target)
    tile = max(8, _round_up(n, 8))
    return tile, tile


# ---------------------------------------------------------------------------
# Pallas kernels
# ---------------------------------------------------------------------------

def _matmul_kernel(x_ref, w_ref, o_ref):
    # x: (tr, Din), w: (Din, tn) -> o: (tr, tn)
    o_ref[...] = jnp.dot(
        x_ref[...], w_ref[...], preferred_element_type=jnp.float32
    ).astype(o_ref.dtype)


def _matmul_bias_kernel(x_ref, w_ref, b_ref, o_ref):
    # x: (tr, Din), w: (Din, tn), b: (1, tn) -> o: (tr, tn)
    acc = jnp.dot(x_ref[...], w_ref[...], preferred_element_type=jnp.float32)
    o_ref[...] = (acc + b_ref[...].astype(jnp.float32)).astype(o_ref.dtype)


def _flash_attn_kernel(q_ref, k_ref, v_ref, o_ref, m_scr, l_scr, acc_scr, *,
                       heads, dim_head, kv_tile, valid_m):
    """Head-fused flash attention over (1, tq, H*dh) / (1, tk, H*dh) blocks.

    grid = (B, N//tq, M//tk); KV (reduction) axis last; fp32 m/l/acc scratch.
    `scale` is pre-folded into the Q projection weight.  `valid_m` (static) is
    the un-padded context length; padded key columns get a -1e30 score bias.
    """
    kv_i = pl.program_id(2)

    @pl.when(kv_i == 0)
    def _():
        m_scr[...] = jnp.full_like(m_scr, -jnp.inf)
        l_scr[...] = jnp.zeros_like(l_scr)
        acc_scr[...] = jnp.zeros_like(acc_scr)

    if valid_m is not None:
        col = kv_i * kv_tile + lax.broadcasted_iota(jnp.int32, (1, kv_tile), 1)
        neg_bias = jnp.where(col < valid_m, 0.0, -1e30).astype(jnp.float32)

    for h in range(heads):                     # static unroll over heads
        sl = slice(h * dim_head, (h + 1) * dim_head)
        q_h = q_ref[0, :, sl]                  # (tq, dh); scale already folded in
        k_h = k_ref[0, :, sl]                  # (tk, dh)
        v_h = v_ref[0, :, sl]                  # (tk, dh)

        # s = q @ k^T, fp32 MXU accumulation, no explicit transpose.
        s = lax.dot_general(q_h, k_h, (((1,), (1,)), ((), ())),
                            preferred_element_type=jnp.float32)   # (tq, tk)
        if valid_m is not None:
            s = s + neg_bias

        # Online softmax (numerically stable, fp32 carry).
        m_prev = m_scr[h]                                          # (tq, 1)
        m_new = jnp.maximum(m_prev, jnp.max(s, axis=-1, keepdims=True))
        alpha = jnp.exp(m_prev - m_new)
        p = jnp.exp(s - m_new)                                     # (tq, tk) fp32
        l_scr[h] = alpha * l_scr[h] + jnp.sum(p, axis=-1, keepdims=True)
        acc_scr[h] = alpha * acc_scr[h] + jnp.dot(
            p.astype(v_h.dtype), v_h, preferred_element_type=jnp.float32)
        m_scr[h] = m_new

    @pl.when(kv_i == pl.num_programs(2) - 1)
    def _():
        outs = []
        for h in range(heads):
            inv_l = pl.reciprocal(l_scr[h], approx=True)           # EUP slot
            outs.append(acc_scr[h] * inv_l)
        # single lane-dense (tq, H*dh) store -> full-width HBM writeback
        o_ref[0] = jnp.concatenate(outs, axis=-1).astype(o_ref.dtype)


# ---------------------------------------------------------------------------
# Wrappers
# ---------------------------------------------------------------------------

def _pallas_matmul(x, w, bias=None, *, row_tile=512):
    """x: (R, Din) @ w: (Din, Dout) [+ bias] -> (R, Dout) in x.dtype.

    Row-tiled, and column-tiled when the weight is large.  The grid is ordered
    (cols, rows) with rows innermost so each weight column block stays resident
    across the row sweep (no full-width double-buffered weight in VMEM).
    """
    R, Din = x.shape
    Dout = w.shape[1]
    tr = _pick_row_tile(R, row_tile)
    tn = _pick_col_tile(Din, Dout, x.dtype.itemsize)
    grid = (Dout // tn, R // tr)

    x_spec = pl.BlockSpec((tr, Din), lambda j, i: (i, 0))
    w_spec = pl.BlockSpec((Din, tn), lambda j, i: (0, j))
    o_spec = pl.BlockSpec((tr, tn), lambda j, i: (i, j))

    if bias is None:
        kernel, in_specs, args = _matmul_kernel, [x_spec, w_spec], (x, w)
    else:
        b_spec = pl.BlockSpec((1, tn), lambda j, i: (0, j))
        kernel = _matmul_bias_kernel
        in_specs = [x_spec, w_spec, b_spec]
        args = (x, w, bias.reshape(1, Dout))

    return pl.pallas_call(
        kernel,
        out_shape=jax.ShapeDtypeStruct((R, Dout), x.dtype),
        grid_spec=pltpu.PrefetchScalarGridSpec(
            num_scalar_prefetch=0,
            grid=grid,
            in_specs=in_specs,
            out_specs=o_spec,
        ),
        compiler_params=pltpu.CompilerParams(
            dimension_semantics=("parallel", "parallel"),
            vmem_limit_bytes=_vmem_limit_bytes()),
    )(*args)


def _pallas_flash_attention(q, k, v, *, heads, dim_head, q_tile=256, kv_tile=512):
    """q: (B, N, H*dh), k/v: (B, M, H*dh) -> (B, N, H*dh) in q.dtype."""
    B, N, HD = q.shape
    M = k.shape[1]
    assert HD == heads * dim_head

    tq, n_pad = _tile_and_pad(N, q_tile)
    tk, m_pad = _tile_and_pad(M, kv_tile)
    if n_pad != N:
        q = jnp.pad(q, ((0, 0), (0, n_pad - N), (0, 0)))
    if m_pad != M:
        k = jnp.pad(k, ((0, 0), (0, m_pad - M), (0, 0)))
        v = jnp.pad(v, ((0, 0), (0, m_pad - M), (0, 0)))

    kernel = functools.partial(
        _flash_attn_kernel, heads=heads, dim_head=dim_head, kv_tile=tk,
        valid_m=(M if m_pad != M else None))

    itemsize = q.dtype.itemsize
    cost = pl.CostEstimate(
        flops=4 * B * heads * n_pad * m_pad * dim_head,     # two matmuls per head
        transcendentals=B * heads * n_pad * m_pad,          # exp on score tiles
        bytes_accessed=itemsize * (q.size + (n_pad // tq) * (k.size + v.size)
                                   + B * n_pad * HD),
    )

    out = pl.pallas_call(
        kernel,
        out_shape=jax.ShapeDtypeStruct((B, n_pad, HD), q.dtype),
        grid_spec=pltpu.PrefetchScalarGridSpec(
            num_scalar_prefetch=0,
            grid=(B, n_pad // tq, m_pad // tk),             # KV (reduction) axis last
            in_specs=[
                pl.BlockSpec((1, tq, HD), lambda b, qi, ki: (b, qi, 0)),
                pl.BlockSpec((1, tk, HD), lambda b, qi, ki: (b, ki, 0)),
                pl.BlockSpec((1, tk, HD), lambda b, qi, ki: (b, ki, 0)),
            ],
            out_specs=pl.BlockSpec((1, tq, HD), lambda b, qi, ki: (b, qi, 0)),
            scratch_shapes=[
                pltpu.VMEM((heads, tq, 1), jnp.float32),         # m (running max)
                pltpu.VMEM((heads, tq, 1), jnp.float32),         # l (running denom)
                pltpu.VMEM((heads, tq, dim_head), jnp.float32),  # acc
            ],
        ),
        compiler_params=pltpu.CompilerParams(
            dimension_semantics=("parallel", "parallel", "arbitrary"),
            vmem_limit_bytes=_vmem_limit_bytes()),
        cost_estimate=cost,
    )(q, k, v)

    if n_pad != N:
        out = out[:, :N]
    return out


# ---------------------------------------------------------------------------
# Parameters
# ---------------------------------------------------------------------------

def init_cross_attention_params(key, query_dim, context_dim=None, heads=8,
                                dim_head=64, dtype=jnp.float32):
    """Raw parameters mirroring the PyTorch module's shapes (weights as (in, out))."""
    if context_dim is None:
        context_dim = query_dim
    inner_dim = dim_head * heads
    k0, k1, k2, k3 = jax.random.split(key, 4)
    return {
        "to_q": jax.random.normal(k0, (query_dim, inner_dim), dtype) * 0.02,
        "to_k": jax.random.normal(k1, (context_dim, inner_dim), dtype) * 0.02,
        "to_v": jax.random.normal(k2, (context_dim, inner_dim), dtype) * 0.02,
        "to_out_w": jax.random.normal(k3, (inner_dim, query_dim), dtype) * 0.02,
        "to_out_b": jnp.zeros((query_dim,), dtype),
    }


def prepare_cross_attention_params(params, *, dim_head):
    """One-time prep: fold the softmax scale into W_q and fuse projection weights
    (hoisted out of forward so the concats are not per-call HBM copies)."""
    scale = dim_head ** (-0.5)
    w_q = params["to_q"] * scale
    prepared = {
        "w_q": w_q,
        "w_kv": jnp.concatenate([params["to_k"], params["to_v"]], axis=1),
        "to_out_w": params["to_out_w"],
        "to_out_b": params["to_out_b"],
    }
    if params["to_q"].shape[0] == params["to_k"].shape[0]:
        prepared["w_qkv"] = jnp.concatenate(
            [w_q, params["to_k"], params["to_v"]], axis=1)
    return prepared


# ---------------------------------------------------------------------------
# Forward
# ---------------------------------------------------------------------------

def cross_attention_forward(prepared, x, context=None, *, heads, dim_head,
                            compute_dtype=None):
    """Pallas implementation of CrossAttention.forward (mask=None, dropout=0.0).

    `compute_dtype=jnp.bfloat16` halves HBM traffic on the memory-bound
    projections (recommended on v6e/v7x); MXU accumulation and the softmax
    state stay fp32 either way.
    """
    out_dtype = x.dtype
    self_attention = context is None
    if self_attention:
        context = x
    if compute_dtype is not None:
        x = x.astype(compute_dtype)
        context = context.astype(compute_dtype)
    cd = x.dtype

    B, N, query_dim = x.shape
    _, M, context_dim = context.shape
    inner_dim = heads * dim_head

    x2d = x.reshape(B * N, query_dim)

    if self_attention and "w_qkv" in prepared:
        # fused QKV projection: the activation is read from HBM once
        qkv = _pallas_matmul(x2d, prepared["w_qkv"].astype(cd))
        q2d = qkv[:, :inner_dim]
        k2d = qkv[:, inner_dim:2 * inner_dim]
        v2d = qkv[:, 2 * inner_dim:]
        kv_len = N
    else:
        q2d = _pallas_matmul(x2d, prepared["w_q"].astype(cd))
        kv = _pallas_matmul(context.reshape(B * M, context_dim),
                            prepared["w_kv"].astype(cd))
        k2d = kv[:, :inner_dim]
        v2d = kv[:, inner_dim:]
        kv_len = M

    # activations stay in the lane-dense (B, seq, H*dh) layout -- no head
    # split/merge transposes; heads are handled inside the flash kernel
    q3 = q2d.reshape(B, N, inner_dim)
    k3 = k2d.reshape(B, kv_len, inner_dim)
    v3 = v2d.reshape(B, kv_len, inner_dim)

    attn = _pallas_flash_attention(q3, k3, v3, heads=heads, dim_head=dim_head)

    # to_out: Linear(inner_dim, query_dim) + bias; Dropout(0.0) is identity
    out2d = _pallas_matmul(attn.reshape(B * N, inner_dim),
                           prepared["to_out_w"].astype(cd),
                           bias=prepared["to_out_b"].astype(cd))
    out = out2d.reshape(B, N, query_dim)
    if out.dtype != out_dtype:
        out = out.astype(out_dtype)
    return out


# ---------------------------------------------------------------------------
# Reference (pure JAX) for sanity check
# ---------------------------------------------------------------------------

def cross_attention_reference(params, x, context=None, *, heads, dim_head):
    if context is None:
        context = x
    B, N, _ = x.shape
    _, M, _ = context.shape
    scale = dim_head ** (-0.5)
    q = x @ params["to_q"]
    k = context @ params["to_k"]
    v = context @ params["to_v"]

    def split_heads(t, n):
        return jnp.transpose(
            t.reshape(B, n, heads, dim_head), (0, 2, 1, 3)
        ).reshape(B * heads, n, dim_head)

    qh, kh, vh = split_heads(q, N), split_heads(k, M), split_heads(v, M)
    sim = jnp.einsum("bid,bjd->bij", qh.astype(jnp.float32),
                     kh.astype(jnp.float32)) * scale
    p = jax.nn.softmax(sim, axis=-1)
    out = jnp.einsum("bij,bjd->bid", p, vh.astype(jnp.float32)).astype(x.dtype)
    out = jnp.transpose(out.reshape(B, heads, N, dim_head), (0, 2, 1, 3))
    out = out.reshape(B, N, heads * dim_head)
    return out @ params["to_out_w"] + params["to_out_b"]


# ---------------------------------------------------------------------------
# Main
# ---------------------------------------------------------------------------

if __name__ == "__main__":
    key = jax.random.PRNGKey(0)
    kp, kx, kc, kx2 = jax.random.split(key, 4)

    # small shapes consistent with the module
    B, N, M = 2, 16, 8
    query_dim, context_dim = 32, 32
    heads, dim_head = 4, 16

    raw_params = init_cross_attention_params(
        kp, query_dim, context_dim, heads=heads, dim_head=dim_head)
    params = prepare_cross_attention_params(raw_params, dim_head=dim_head)

    x = jax.random.normal(kx, (B, N, query_dim), jnp.float32)
    context = jax.random.normal(kc, (B, M, context_dim), jnp.float32)

    # cross-attention path
    out = cross_attention_forward(params, x, context, heads=heads, dim_head=dim_head)
    out = jax.block_until_ready(out)
    ref = cross_attention_reference(raw_params, x, context, heads=heads, dim_head=dim_head)
    assert out.shape == (B, N, query_dim)
    assert jnp.allclose(out, ref, atol=2e-3, rtol=2e-3), "cross-attn mismatch vs reference"

    # self-attention path (context=None -> fused QKV projection)
    out_sa = cross_attention_forward(params, x, None, heads=heads, dim_head=dim_head)
    out_sa = jax.block_until_ready(out_sa)
    ref_sa = cross_attention_reference(raw_params, x, None, heads=heads, dim_head=dim_head)
    assert jnp.allclose(out_sa, ref_sa, atol=2e-3, rtol=2e-3), "self-attn mismatch vs reference"

    # ragged lengths (exercises Q-row padding and KV padding + score mask path)
    N2, M2 = 13, 7
    x2 = jax.random.normal(kx2, (B, N2, query_dim), jnp.float32)
    ctx2 = jax.random.normal(kc, (B, M2, context_dim), jnp.float32)
    out2 = cross_attention_forward(params, x2, ctx2, heads=heads, dim_head=dim_head)
    out2 = jax.block_until_ready(out2)
    ref2 = cross_attention_reference(raw_params, x2, ctx2, heads=heads, dim_head=dim_head)
    assert out2.shape == (B, N2, query_dim)
    assert jnp.allclose(out2, ref2, atol=2e-3, rtol=2e-3), "ragged cross-attn mismatch"

    print("KERNEL_OK")
</pallas_src>

<mosaic_0001>
module attributes {stable_mosaic.version = 11 : i64} {
  func.func @_matmul_kernel(%arg0: i32, %arg1: i32, %arg2: memref<32x32xf32, #tpu.memory_space<vmem>>, %arg3: memref<32x64xf32, #tpu.memory_space<vmem>>, %arg4: memref<32x64xf32, #tpu.memory_space<vmem>>) attributes {dimension_semantics = [#tpu.dimension_semantics<parallel>, #tpu.dimension_semantics<parallel>], iteration_bounds = array<i64: 1, 1>, scalar_prefetch = 0 : i64, scratch_operands = 0 : i64, tpu.core_type = #tpu.core_type<tc>, window_params = [{transform_indices = @transform_0, window_bounds = array<i64: 32, 32>}, {transform_indices = @transform_1, window_bounds = array<i64: 32, 64>}, {transform_indices = @transform_2, window_bounds = array<i64: 32, 64>}]} {
    %c0 = arith.constant 0 : index
    %c0_0 = arith.constant 0 : index
    %0 = vector.load %arg2[%c0, %c0_0] : memref<32x32xf32, #tpu.memory_space<vmem>>, vector<32x32xf32>
    %c0_1 = arith.constant 0 : index
    %c0_2 = arith.constant 0 : index
    %1 = vector.load %arg3[%c0_1, %c0_2] : memref<32x64xf32, #tpu.memory_space<vmem>>, vector<32x64xf32>
    %cst = arith.constant dense<0.000000e+00> : vector<32x64xf32>
    %2 = tpu.matmul %0, %1, %cst {dimension_numbers = #tpu.dot_dimension_numbers<[1], [0], [0], [1], [0, 0, 1, 1], [], []>} : vector<32x32xf32>, vector<32x64xf32>, vector<32x64xf32> -> vector<32x64xf32>
    %c0_3 = arith.constant 0 : index
    %c0_4 = arith.constant 0 : index
    %3 = vector.load %arg4[%c0_3, %c0_4] : memref<32x64xf32, #tpu.memory_space<vmem>>, vector<32x64xf32>
    tpu.vector_store %arg4[%c0_3, %c0_4], %2 {strides = array<i32>} : memref<32x64xf32, #tpu.memory_space<vmem>>, vector<32x64xf32>,
    return
  }
  func.func @transform_0(%arg0: i32, %arg1: i32) -> (i32, i32) {
    %c0_i32 = arith.constant 0 : i32
    %c0_i32_0 = arith.constant 0 : i32
    return %arg1, %c0_i32 : i32, i32
  }
  func.func @transform_1(%arg0: i32, %arg1: i32) -> (i32, i32) {
    %c0_i32 = arith.constant 0 : i32
    %c0_i32_0 = arith.constant 0 : i32
    return %c0_i32, %arg0 : i32, i32
  }
  func.func @transform_2(%arg0: i32, %arg1: i32) -> (i32, i32) {
    %c0_i32 = arith.constant 0 : i32
    return %arg1, %arg0 : i32, i32
  }
}

</mosaic_0001>

<llo_original>
// kernel: tpu_custom_call.1
$region0: #{tpu_custom_call.1}
  #allocation0 [shape = 'u32[]', space=smem, size = 0x4, offset = 0x4, fixed_abs, tag = 'smem constant byte address 0x4 - core index']
  #allocation1 [shape = 'u32[144,128]{1,0:T(1,128)}', space=vmem, size = 0x12000, scoped, tag = 'internal scratch']
  %s0 = inlined_call_operand.hbm [shape: f32[32,32], index: 0, kind: input, shape index: {}]
  %s1 = inlined_call_operand.hbm [shape: f32[32,64], index: 1, kind: input, shape index: {}]
  %s2 = inlined_call_operand.hbm [shape: f32[32,64], index: 2, kind: output, shape index: {}]
  %s3 = sld [smem:[#allocation0]]
  $region26: #{tpu_custom_call.1} parent=0
    _
  %s5 = ssub.s32 1, %s3
  %s6 = scalar_select 0, %s5, %s3
  $region1: #{tpu_custom_call.1} parent=0
    #allocation2 [shape = 'u8[16384]{0}', space=vmem, size = 0x4000, scoped, tag = 'input window, operand 0, single buffered']
    #allocation3 [shape = 's32[1]{0}', space=sflag, size = 0x4, scoped, tag = 'scoped memory for tpu_custom_call.1']
    #allocation4 [shape = 's32[1]{0}', space=sflag, size = 0x4, scoped, tag = 'scoped memory for tpu_custom_call.1']
    #allocation5 [shape = 'u8[16384]{0}', space=vmem, size = 0x4000, scoped, tag = 'input window, operand 1, single buffered']
    #allocation6 [shape = 's32[1]{0}', space=sflag, size = 0x4, scoped, tag = 'scoped memory for tpu_custom_call.1']
    #allocation7 [shape = 'u8[16384]{0}', space=vmem, size = 0x4000, scoped, tag = 'output window, operand 0, single buffered']
    %7 = vsyncpa [#allocation3], 0
    %8 = vsyncpa [#allocation6], 0
    %9 = vsyncpa [#allocation4], 0
    // Predicated region
    $region2: #{tpu_custom_call.1} parent=1 // pred_check
      _
    $region3: #{tpu_custom_call.1} parent=1 // pred_check_branch
      %11 = sbr.rel (0) target = $region5
    $region4: #{tpu_custom_call.1} parent=1 // pred_region
      %s13 = ssub.s32 512, 512
      %14 = vsyncadd [#allocation3], %s13
      %s15 = sshll.u32 [#allocation2], 4
      %s16 = int_to_ptr.vmem [resolvable:$true] %s15
      %21 = dma.hbm_to_vmem [thread:$0]  %s0, 512, %s16, [#allocation3], 128, 128, 8
    $region5: #{tpu_custom_call.1} parent=1 // pred_fallthru
      _
    // Predicated region
    $region6: #{tpu_custom_call.1} parent=1 // pred_check
      _
    $region7: #{tpu_custom_call.1} parent=1 // pred_check_branch
      %23 = sbr.rel (0) target = $region9
    $region8: #{tpu_custom_call.1} parent=1 // pred_region
      %s25 = ssub.s32 512, 512
      %26 = vsyncadd [#allocation6], %s25
      %s27 = sshll.u32 [#allocation5], 4
      %s28 = int_to_ptr.vmem [resolvable:$true] %s27
      %33 = dma.hbm_to_vmem [thread:$0]  %s1, 512, %s28, [#allocation6], 128, 128, 8
    $region9: #{tpu_custom_call.1} parent=1 // pred_fallthru
      _
    // Predicated region
    $region10: #{tpu_custom_call.1} parent=1 // pred_check
      _
    $region11: #{tpu_custom_call.1} parent=1 // pred_check_branch
      %35 = sbr.rel (0) target = $region13
    $region12: #{tpu_custom_call.1} parent=1 // pred_region
      %36 = dma.done [#allocation3], 512
    $region13: #{tpu_custom_call.1} parent=1 // pred_fallthru
      _
    // Predicated region
    $region14: #{tpu_custom_call.1} parent=1 // pred_check
      _
    $region15: #{tpu_custom_call.1} parent=1 // pred_check_branch
      %38 = sbr.rel (0) target = $region17
    $region16: #{tpu_custom_call.1} parent=1 // pred_region
      %39 = dma.done [#allocation6], 512
    $region17: #{tpu_custom_call.1} parent=1 // pred_fallthru
      _
    %v40 = vld [vmem:[#allocation2] sm:$0xff]
    %v41 = vld [vmem:[#allocation2 + $0x8] sm:$0xff]
    %v42 = vld [vmem:[#allocation2 + $0x10] sm:$0xff]
    %v43 = vld [vmem:[#allocation2 + $0x18] sm:$0xff]
    %v44 = vld [vmem:[#allocation5] sm:$0xff]
    %v45 = vld [vmem:[#allocation5 + $0x8] sm:$0xff]
    %v46 = vld [vmem:[#allocation5 + $0x10] sm:$0xff]
    %v47 = vld [vmem:[#allocation5 + $0x18] sm:$0xff]
    %vm48 = vcmask 261120
    %v50 = vsel %vm48, %v40, 0
    %v53 = vsel %vm48, %v41, 0
    %v56 = vsel %vm48, %v42, 0
    %v59 = vsel %vm48, %v43, 0
    %61 = vmatprep.subr.mxu0 0.0
    %62 = vmatpush1.msra.mxu0 %v44
    %63 = vmatprep.subr.mxu0 0.0
    %64 = vmatpush1.msra.mxu0 %v45
    %65 = vmatprep.subr.mxu0 0.0
    %66 = vmatpush1.msra.mxu0 %v46
    %67 = vmatprep.subr.mxu0 0.0
    %68 = vmatpush1.msra.mxu0 %v47
    %69 = vmatprep.subr.mxu0 0.0
    %70 = vmatpush1.msra.mxu0 0.0
    %71 = vmatprep.subr.mxu0 0.0
    %72 = vmatpush1.msra.mxu0 0.0
    %73 = vmatprep.subr.mxu0 0.0
    %74 = vmatpush1.msra.mxu0 0.0
    %75 = vmatprep.subr.mxu0 0.0
    %76 = vmatpush1.msra.mxu0 0.0
    %77 = vmatprep.subr.mxu0 0.0
    %78 = vmatpush1.msra.mxu0 0.0
    %79 = vmatprep.subr.mxu0 0.0
    %80 = vmatpush1.msra.mxu0 0.0
    %81 = vmatprep.subr.mxu0 0.0
    %82 = vmatpush1.msra.mxu0 0.0
    %83 = vmatprep.subr.mxu0 0.0
    %84 = vmatpush1.msra.mxu0 0.0
    %85 = vmatprep.subr.mxu0 0.0
    %86 = vmatpush1.msra.mxu0 0.0
    %87 = vmatprep.subr.mxu0 0.0
    %88 = vmatpush1.msra.mxu0 0.0
    %89 = vmatprep.subr.mxu0 0.0
    %90 = vmatpush1.msra.mxu0 0.0
    %91 = vmatprep.subr.mxu0 0.0
    %92 = vmatpush1.msra.mxu0 0.0
    %93 = vmatprep.subr.mxu0 0.0
    %94 = vmatpush1.msra.mxu0 0.0
    %95 = vmatprep.subr.mxu0 0.0
    %96 = vmatpush1.msra.mxu0 0.0
    %97 = vmatprep.subr.mxu0 0.0
    %98 = vmatpush1.msra.mxu0 0.0
    %99 = vmatprep.subr.mxu0 0.0
    %100 = vmatpush1.msra.mxu0 0.0
    %101 = vmatprep.subr.mxu0 0.0
    %102 = vmatpush1.msra.mxu0 0.0
    %103 = vmatprep.subr.mxu0 0.0
    %104 = vmatpush1.msra.mxu0 0.0
    %105 = vmatprep.subr.mxu0 0.0
    %106 = vmatpush1.msra.mxu0 0.0
    %107 = vmatprep.subr.mxu0 0.0
    %108 = vmatpush1.msra.mxu0 0.0
    %109 = vmatprep.subr.mxu0 0.0
    %110 = vmatpush1.msra.mxu0 0.0
    %111 = vmatprep.subr.mxu0 0.0
    %112 = vmatpush1.msra.mxu0 0.0
    %113 = vmatprep.subr.mxu0 0.0
    %114 = vmatpush1.msra.mxu0 0.0
    %115 = vmatprep.subr.mxu0 0.0
    %116 = vmatpush1.msra.mxu0 0.0
    %117 = vmatprep.subr.mxu0 0.0
    %118 = vmatpush1.msra.mxu0 0.0
    %119 = vmatprep.subr.mxu0 0.0
    %120 = vmatpush1.msra.mxu0 0.0
    %121 = vmatprep.subr.mxu0 0.0
    %122 = vmatpush1.msra.mxu0 0.0
    %123 = vmatprep.subr.mxu0 0.0
    %124 = vmatpush1.msra.mxu0 0.0
    %125 = vmatprep.mubr.f32.mxu0 0.0
    %126 = vmatmul.mubr.f32.gmra.mrb[0].mxu0 %v50
    %v127 = vpop.f32.mrb[0].mxu0
    %v128 = vadd.f32 0.0, %v127
    %v129 = vpop.f32.mrb[0].mxu0
    %130 = vmatprep.mubr.f32.mxu0 0.0
    %131 = vmatmul.mubr.f32.gmra.mrb[0].mxu0 %v53
    %v132 = vpop.f32.mrb[0].mxu0
    %v133 = vadd.f32 0.0, %v132
    %v134 = vpop.f32.mrb[0].mxu0
    %135 = vmatprep.mubr.f32.mxu0 0.0
    %136 = vmatmul.mubr.f32.gmra.mrb[0].mxu0 %v56
    %v137 = vpop.f32.mrb[0].mxu0
    %v138 = vadd.f32 0.0, %v137
    %v139 = vpop.f32.mrb[0].mxu0
    %140 = vmatprep.mubr.f32.mxu0 0.0
    %141 = vmatmul.mubr.f32.gmra.mrb[0].mxu0 %v59
    %v142 = vpop.f32.mrb[0].mxu0
    %v143 = vadd.f32 0.0, %v142
    %v144 = vpop.f32.mrb[0].mxu0
    %145 = vdwg.mxu0
    %vm146 = vcmask 523264
    %147 = vst.msk [vmem:[#allocation7] sm:$0xff] %vm146, %v128
    %148 = vst.msk [vmem:[#allocation7 + $0x8] sm:$0xff] %vm146, %v133
    %149 = vst.msk [vmem:[#allocation7 + $0x10] sm:$0xff] %vm146, %v138
    %150 = vst.msk [vmem:[#allocation7 + $0x18] sm:$0xff] %vm146, %v143
    // Predicated region
    $region18: #{tpu_custom_call.1} parent=1 // pred_check
      _
    $region19: #{tpu_custom_call.1} parent=1 // pred_check_branch
      %152 = sbr.rel (0) target = $region21
    $region20: #{tpu_custom_call.1} parent=1 // pred_region
      %s154 = ssub.s32 512, 512
      %155 = vsyncadd [#allocation4], %s154
      %s156 = sshll.u32 [#allocation7], 4
      %s157 = int_to_ptr.vmem [resolvable:$true] %s156
      %162 = dma.vmem_to_hbm [thread:$0]  %s157, 512, %s2, [#allocation4], 128, 128, 8
    $region21: #{tpu_custom_call.1} parent=1 // pred_fallthru
      _
    // Predicated region
    $region22: #{tpu_custom_call.1} parent=1 // pred_check
      _
    $region23: #{tpu_custom_call.1} parent=1 // pred_check_branch
      %164 = sbr.rel (0) target = $region25
    $region24: #{tpu_custom_call.1} parent=1 // pred_region
      %165 = dma.done [#allocation4], 512
    $region25: #{tpu_custom_call.1} parent=1 // pred_fallthru
      _
    %166 = vsyncpa [#allocation3], 1
    %167 = vsyncpa [#allocation6], 1
    %168 = vsyncpa [#allocation4], 1

</llo_original>
